<compile_context>
chip_gen: v6e
topology: v6e:2x2x1
jax: 0.10.0
libtpu: 0.0.40
codegen_flags: <defaults>
</compile_context>

<pallas_src>
import jax
import jax.numpy as jnp
from jax.experimental import pallas as pl
from jax.experimental.pallas import tpu as pltpu

RNN_HIDDEN = 64
AFF_HIDDEN = 128
OUT_W = 128          # packed output width: [hn (64) | r | v | zero pad]
XPAD = 128           # padded input lane width (input_space must be <= 128)
R_LANE = 64
V_LANE = 65

# weight slab row layout
_WX_ROW = 0                    # rows   0..127 : W_ih^T (rows 0..D-1), cols 0..63
_WH_ROW = 128                  # rows 128..255 : W_hh^T (rows 0..63),  cols 0..63
_W1_ROW = 256                  # rows 256..383 : W1^T   (rows 0..63),  all cols
_WHD_ROW = 384                 # rows 384..511 : heads  (col 64 = wr, col 65 = wv)
_B_ROW = 512                   # rows 512..519 : 0 = b_ih+b_hh, 1 = b1, 2 = b_heads
SLAB_ROWS = 520


def _irlv_kernel(x_ref, h0_ref, w_ref, out_ref, h_scr):
    t = pl.program_id(0)

    @pl.when(t == 0)
    def _():
        h_scr[...] = h0_ref[...]          # (B, 128), lanes 64..127 are zero

    bias = w_ref[_B_ROW:_B_ROW + 8, :]    # (8, 128): row 0 b_rnn, row 1 b1, row 2 b_heads
    x = x_ref[0]                          # (B, 128) padded input
    h_prev = h_scr[...]                   # (B, 128)

    # Fused RNN cell: tanh(x @ Wx + h_prev @ Wh + (b_ih + b_hh)).
    pre = (jnp.dot(x, w_ref[_WX_ROW:_WX_ROW + 128, :],
                   preferred_element_type=jnp.float32)
           + jnp.dot(h_prev, w_ref[_WH_ROW:_WH_ROW + 128, :],
                     preferred_element_type=jnp.float32)
           + bias[0:1, :])
    h = jnp.tanh(pre)                     # lanes 64..127 stay exactly 0

    # affline1 + ReLU (rows 64..127 of W1 are zero, so the zero lanes of h are inert).
    y = jnp.maximum(
        jnp.dot(h, w_ref[_W1_ROW:_W1_ROW + 128, :],
                preferred_element_type=jnp.float32) + bias[1:2, :], 0.0)

    # Both 1-unit heads in one matmul: wr in column 64, wv in column 65.
    rv = (jnp.dot(y, w_ref[_WHD_ROW:_WHD_ROW + 128, :],
                  preferred_element_type=jnp.float32) + bias[2:3, :])

    h_scr[...] = h                        # carry recurrence to next grid step
    out_ref[0] = h + rv                   # lanes 0..63 = hn, 64 = r, 65 = v


def init_params(key, input_space):
    """Deterministic PyTorch-style uniform init: U(-1/sqrt(fan_in_ish), +)."""
    ks = jax.random.split(key, 10)

    def u(k, shape, fan):
        bound = 1.0 / (fan ** 0.5)
        return jax.random.uniform(k, shape, jnp.float32, -bound, bound)

    return {
        # nn.RNN(input_space, 64): init bound = 1/sqrt(hidden_size)
        "w_ih": u(ks[0], (RNN_HIDDEN, input_space), RNN_HIDDEN),
        "w_hh": u(ks[1], (RNN_HIDDEN, RNN_HIDDEN), RNN_HIDDEN),
        "b_ih": u(ks[2], (RNN_HIDDEN,), RNN_HIDDEN),
        "b_hh": u(ks[3], (RNN_HIDDEN,), RNN_HIDDEN),
        # nn.Linear(64, 128)
        "w1": u(ks[4], (AFF_HIDDEN, RNN_HIDDEN), RNN_HIDDEN),
        "b1": u(ks[5], (AFF_HIDDEN,), RNN_HIDDEN),
        # nn.Linear(128, 1) x2
        "wr": u(ks[6], (1, AFF_HIDDEN), AFF_HIDDEN),
        "br": u(ks[7], (1,), AFF_HIDDEN),
        "wv": u(ks[8], (1, AFF_HIDDEN), AFF_HIDDEN),
        "bv": u(ks[9], (1,), AFF_HIDDEN),
    }


def pack_params(params):
    """One-time packing of PyTorch-layout params into a single (520, 128) slab."""
    D = params["w_ih"].shape[1]                       # input_space
    assert D <= XPAD, "input_space must be <= 128"

    slab = jnp.zeros((SLAB_ROWS, OUT_W), jnp.float32)
    slab = slab.at[_WX_ROW:_WX_ROW + D, :RNN_HIDDEN].set(params["w_ih"].T)
    slab = slab.at[_WH_ROW:_WH_ROW + RNN_HIDDEN, :RNN_HIDDEN].set(params["w_hh"].T)
    slab = slab.at[_W1_ROW:_W1_ROW + RNN_HIDDEN, :].set(params["w1"].T)
    slab = slab.at[_WHD_ROW:_WHD_ROW + AFF_HIDDEN, R_LANE].set(params["wr"][0])
    slab = slab.at[_WHD_ROW:_WHD_ROW + AFF_HIDDEN, V_LANE].set(params["wv"][0])
    slab = slab.at[_B_ROW, :RNN_HIDDEN].set(params["b_ih"] + params["b_hh"])
    slab = slab.at[_B_ROW + 1, :].set(params["b1"])
    slab = slab.at[_B_ROW + 2, R_LANE].set(params["br"][0])
    slab = slab.at[_B_ROW + 2, V_LANE].set(params["bv"][0])
    return {"slab": slab, "input_space": D}


def forward_rollout(packed, s, a, r, d, hidden_state=None):
    """Run T timesteps x B environments in ONE pallas_call.

    s: (T, B, obs_dim); a, r, d: (T, B); hidden_state: (B, 64) or None.
    Returns (intrinsic_reward (T,B,1), lifetime_value (T,B,1), hn (T,B,64)).
    """
    slab = packed["slab"]
    s = jnp.asarray(s, jnp.float32)
    a = jnp.asarray(a, jnp.float32)
    r = jnp.asarray(r, jnp.float32)
    d = jnp.asarray(d, jnp.float32)
    T, B = s.shape[0], s.shape[1]

    x = jnp.concatenate([s, a[..., None], r[..., None], d[..., None]], axis=-1)
    D = x.shape[-1]
    xp = jnp.zeros((T, B, XPAD), jnp.float32).at[:, :, :D].set(x)

    h0 = jnp.zeros((B, OUT_W), jnp.float32)
    if hidden_state is not None:
        h0 = h0.at[:, :RNN_HIDDEN].set(
            jnp.asarray(hidden_state, jnp.float32).reshape(B, RNN_HIDDEN))

    flops = 4 * 2 * T * B * 128 * 128            # four (B,128)x(128,128) dots / step
    bytes_accessed = 4 * (slab.size + xp.size + h0.size + T * B * OUT_W)

    out = pl.pallas_call(
        _irlv_kernel,
        out_shape=jax.ShapeDtypeStruct((T, B, OUT_W), jnp.float32),
        grid=(T,),
        in_specs=[
            pl.BlockSpec((1, B, XPAD), lambda t: (t, 0, 0)),   # per-step inputs
            pl.BlockSpec((B, OUT_W), lambda t: (0, 0)),        # h0 (resident)
            pl.BlockSpec((SLAB_ROWS, OUT_W), lambda t: (0, 0)),  # weight slab (resident)
        ],
        out_specs=pl.BlockSpec((1, B, OUT_W), lambda t: (t, 0, 0)),
        scratch_shapes=[pltpu.VMEM((B, OUT_W), jnp.float32)],  # recurrent hidden state
        compiler_params=pltpu.CompilerParams(
            dimension_semantics=("arbitrary",)),               # sequential recurrence
        cost_estimate=pl.CostEstimate(
            flops=flops, transcendentals=T * B * RNN_HIDDEN,
            bytes_accessed=bytes_accessed),
    )(xp, h0, slab)

    hn = out[:, :, :RNN_HIDDEN]
    intrinsic_reward = out[:, :, R_LANE:R_LANE + 1]
    lifetime_value = out[:, :, V_LANE:V_LANE + 1]
    return intrinsic_reward, lifetime_value, hn


def forward(packed, s0, a0, r1, d1, hidden_state=None):
    """Single-step, unbatched path mirroring IntrinsicRewardAndLifetimeValue.forward."""
    s0 = jnp.asarray(s0, jnp.float32).reshape(1, 1, -1)
    a = jnp.asarray(a0, jnp.float32).reshape(1, 1)
    r = jnp.asarray(r1, jnp.float32).reshape(1, 1)
    d = jnp.asarray(d1, jnp.float32).reshape(1, 1)
    h0 = (None if hidden_state is None
          else jnp.asarray(hidden_state, jnp.float32).reshape(1, RNN_HIDDEN))
    ri, vi, hn = forward_rollout(packed, s0, a, r, d, h0)
    return ri[0], vi[0], hn[0]                     # (1,1), (1,1), (1,64)


def _reference_step(params, x, h):
    """Pure-JAX reference for one step: x (B, D), h (B, 64)."""
    h = jnp.tanh(x @ params["w_ih"].T + params["b_ih"]
                 + h @ params["w_hh"].T + params["b_hh"])
    y = jax.nn.relu(h @ params["w1"].T + params["b1"])
    rr = y @ params["wr"].T + params["br"]
    vv = y @ params["wv"].T + params["bv"]
    return rr, vv, h


if __name__ == "__main__":
    key = jax.random.PRNGKey(0)
    obs_dim = 29                       # s has 29 features
    input_space = obs_dim + 3          # + action, reward, done -> 32
    T, B = 8, 8                        # small rollout: 8 steps x 8 environments

    params = init_params(key, input_space)
    packed = pack_params(params)       # one-time weight packing (single slab)

    # ---- batched multi-step rollout through one pallas_call -------------------
    ks = jax.random.split(jax.random.fold_in(key, 1), 4)
    s = jax.random.normal(ks[0], (T, B, obs_dim), jnp.float32)
    a = jax.random.randint(ks[1], (T, B), 0, 4).astype(jnp.float32)
    r = 0.1 * jax.random.normal(ks[2], (T, B), jnp.float32)
    d = (jax.random.uniform(ks[3], (T, B)) < 0.1).astype(jnp.float32)

    rollout = jax.jit(forward_rollout)
    r_out, v_out, hn_out = rollout(packed, s, a, r, d)
    jax.block_until_ready((r_out, v_out, hn_out))

    x_all = jnp.concatenate([s, a[..., None], r[..., None], d[..., None]], axis=-1)
    h_ref = jnp.zeros((B, RNN_HIDDEN), jnp.float32)
    rs, vs, hs = [], [], []
    for t in range(T):
        rr, vv, h_ref = _reference_step(params, x_all[t], h_ref)
        rs.append(rr), vs.append(vv), hs.append(h_ref)
    r_ref, v_ref, h_all_ref = jnp.stack(rs), jnp.stack(vs), jnp.stack(hs)

    assert jnp.allclose(r_out, r_ref, atol=1e-4, rtol=1e-4), "intrinsic reward mismatch"
    assert jnp.allclose(v_out, v_ref, atol=1e-4, rtol=1e-4), "lifetime value mismatch"
    assert jnp.allclose(hn_out, h_all_ref, atol=1e-4, rtol=1e-4), "hidden state mismatch"

    # ---- single-step, unbatched path (original module semantics) --------------
    fwd = jax.jit(forward)
    s0 = jax.random.normal(jax.random.fold_in(key, 100), (obs_dim,), jnp.float32)
    a0, r1, d1 = 2.0, 0.5, 0.0

    ri, vi, hni = fwd(packed, s0, a0, r1, d1)          # hidden_state=None
    jax.block_until_ready((ri, vi, hni))
    x0 = jnp.concatenate([s0.reshape(1, -1),
                          jnp.array([[a0]], jnp.float32),
                          jnp.array([[r1]], jnp.float32),
                          jnp.array([[d1]], jnp.float32)], axis=1)
    ri_ref, vi_ref, hni_ref = _reference_step(params, x0, jnp.zeros((1, RNN_HIDDEN)))
    assert jnp.allclose(ri, ri_ref, atol=1e-4, rtol=1e-4)
    assert jnp.allclose(vi, vi_ref, atol=1e-4, rtol=1e-4)
    assert jnp.allclose(hni, hni_ref, atol=1e-4, rtol=1e-4)

    # step 2: feed hn back as hidden_state (recurrence path of the single-step API)
    s1 = jax.random.normal(jax.random.fold_in(key, 101), (obs_dim,), jnp.float32)
    r2, v2, hn2 = fwd(packed, s1, 1.0, -0.25, 1.0, hni)
    jax.block_until_ready((r2, v2, hn2))
    x1 = jnp.concatenate([s1.reshape(1, -1),
                          jnp.array([[1.0]], jnp.float32),
                          jnp.array([[-0.25]], jnp.float32),
                          jnp.array([[1.0]], jnp.float32)], axis=1)
    r2_ref, v2_ref, hn2_ref = _reference_step(params, x1, hni_ref)
    assert jnp.allclose(r2, r2_ref, atol=1e-4, rtol=1e-4)
    assert jnp.allclose(v2, v2_ref, atol=1e-4, rtol=1e-4)
    assert jnp.allclose(hn2, hn2_ref, atol=1e-4, rtol=1e-4)

    print("KERNEL_OK")
</pallas_src>

<mosaic_0001>
module attributes {stable_mosaic.version = 11 : i64} {
  func.func @_irlv_kernel(%arg0: i32, %arg1: memref<1x8x128xf32, #tpu.memory_space<vmem>>, %arg2: memref<8x128xf32, #tpu.memory_space<vmem>>, %arg3: memref<520x128xf32, #tpu.memory_space<vmem>>, %arg4: memref<1x8x128xf32, #tpu.memory_space<vmem>>, %arg5: memref<8x128xf32, #tpu.memory_space<vmem>>) attributes {dimension_semantics = [#tpu.dimension_semantics<arbitrary>], iteration_bounds = array<i64: 8>, scalar_prefetch = 0 : i64, scratch_operands = 1 : i64, tpu.core_type = #tpu.core_type<tc>, window_params = [{transform_indices = @transform_0, window_bounds = array<i64: 1, 8, 128>}, {pipeline_mode = #tpu.pipeline_mode<synchronous>, transform_indices = @transform_1, window_bounds = array<i64: 8, 128>}, {pipeline_mode = #tpu.pipeline_mode<synchronous>, transform_indices = @transform_2, window_bounds = array<i64: 520, 128>}, {transform_indices = @transform_3, window_bounds = array<i64: 1, 8, 128>}]} {
    %c0_i32 = arith.constant 0 : i32
    %0 = arith.cmpi eq, %arg0, %c0_i32 : i32
    %1 = arith.extui %0 : i1 to i32
    %c0_i32_0 = arith.constant 0 : i32
    %2 = arith.cmpi ne, %1, %c0_i32_0 : i32
    scf.if %2 {
      %c0_20 = arith.constant 0 : index
      %c0_21 = arith.constant 0 : index
      %33 = vector.load %arg2[%c0_20, %c0_21] : memref<8x128xf32, #tpu.memory_space<vmem>>, vector<8x128xf32>
      %c0_22 = arith.constant 0 : index
      %c0_23 = arith.constant 0 : index
      %34 = vector.load %arg5[%c0_22, %c0_23] : memref<8x128xf32, #tpu.memory_space<vmem>>, vector<8x128xf32>
      tpu.vector_store %arg5[%c0_22, %c0_23], %33 {strides = array<i32>} : memref<8x128xf32, #tpu.memory_space<vmem>>, vector<8x128xf32>,
    } else {
    }
    %c512 = arith.constant 512 : index
    %c0 = arith.constant 0 : index
    %3 = vector.load %arg3[%c512, %c0] : memref<520x128xf32, #tpu.memory_space<vmem>>, vector<8x128xf32>
    %c0_1 = arith.constant 0 : index
    %c0_2 = arith.constant 0 : index
    %c0_3 = arith.constant 0 : index
    %4 = vector.load %arg1[%c0_1, %c0_2, %c0_3] : memref<1x8x128xf32, #tpu.memory_space<vmem>>, vector<1x8x128xf32>
    %5 = vector.shape_cast %4 : vector<1x8x128xf32> to vector<8x128xf32>
    %c0_4 = arith.constant 0 : index
    %c0_5 = arith.constant 0 : index
    %6 = vector.load %arg5[%c0_4, %c0_5] : memref<8x128xf32, #tpu.memory_space<vmem>>, vector<8x128xf32>
    %c0_6 = arith.constant 0 : index
    %c0_7 = arith.constant 0 : index
    %7 = vector.load %arg3[%c0_6, %c0_7] : memref<520x128xf32, #tpu.memory_space<vmem>>, vector<128x128xf32>
    %cst = arith.constant dense<0.000000e+00> : vector<8x128xf32>
    %8 = tpu.matmul %5, %7, %cst {dimension_numbers = #tpu.dot_dimension_numbers<[1], [0], [0], [1], [0, 0, 1, 1], [], []>} : vector<8x128xf32>, vector<128x128xf32>, vector<8x128xf32> -> vector<8x128xf32>
    %c128 = arith.constant 128 : index
    %c0_8 = arith.constant 0 : index
    %9 = vector.load %arg3[%c128, %c0_8] : memref<520x128xf32, #tpu.memory_space<vmem>>, vector<128x128xf32>
    %cst_9 = arith.constant dense<0.000000e+00> : vector<8x128xf32>
    %10 = tpu.matmul %6, %9, %cst_9 {dimension_numbers = #tpu.dot_dimension_numbers<[1], [0], [0], [1], [0, 0, 1, 1], [], []>} : vector<8x128xf32>, vector<128x128xf32>, vector<8x128xf32> -> vector<8x128xf32>
    %11 = arith.addf %8, %10 : vector<8x128xf32>
    %12 = vector.extract_strided_slice %3 {offsets = [0, 0], sizes = [1, 128], strides = [1, 1]} : vector<8x128xf32> to vector<1x128xf32>
    %13 = vector.broadcast %12 : vector<1x128xf32> to vector<8x128xf32>
    %14 = arith.addf %11, %13 : vector<8x128xf32>
    %15 = math.tanh %14 : vector<8x128xf32>
    %c256 = arith.constant 256 : index
    %c0_10 = arith.constant 0 : index
    %16 = vector.load %arg3[%c256, %c0_10] : memref<520x128xf32, #tpu.memory_space<vmem>>, vector<128x128xf32>
    %cst_11 = arith.constant dense<0.000000e+00> : vector<8x128xf32>
    %17 = tpu.matmul %15, %16, %cst_11 {dimension_numbers = #tpu.dot_dimension_numbers<[1], [0], [0], [1], [0, 0, 1, 1], [], []>} : vector<8x128xf32>, vector<128x128xf32>, vector<8x128xf32> -> vector<8x128xf32>
    %18 = vector.extract_strided_slice %3 {offsets = [1, 0], sizes = [1, 128], strides = [1, 1]} : vector<8x128xf32> to vector<1x128xf32>
    %19 = vector.broadcast %18 : vector<1x128xf32> to vector<8x128xf32>
    %20 = arith.addf %17, %19 : vector<8x128xf32>
    %cst_12 = arith.constant 0.000000e+00 : f32
    %21 = vector.broadcast %cst_12 : f32 to vector<8x128xf32>
    %22 = arith.maximumf %20, %21 : vector<8x128xf32>
    %c384 = arith.constant 384 : index
    %c0_13 = arith.constant 0 : index
    %23 = vector.load %arg3[%c384, %c0_13] : memref<520x128xf32, #tpu.memory_space<vmem>>, vector<128x128xf32>
    %cst_14 = arith.constant dense<0.000000e+00> : vector<8x128xf32>
    %24 = tpu.matmul %22, %23, %cst_14 {dimension_numbers = #tpu.dot_dimension_numbers<[1], [0], [0], [1], [0, 0, 1, 1], [], []>} : vector<8x128xf32>, vector<128x128xf32>, vector<8x128xf32> -> vector<8x128xf32>
    %25 = vector.extract_strided_slice %3 {offsets = [2, 0], sizes = [1, 128], strides = [1, 1]} : vector<8x128xf32> to vector<1x128xf32>
    %26 = vector.broadcast %25 : vector<1x128xf32> to vector<8x128xf32>
    %27 = arith.addf %24, %26 : vector<8x128xf32>
    %c0_15 = arith.constant 0 : index
    %c0_16 = arith.constant 0 : index
    %28 = vector.load %arg5[%c0_15, %c0_16] : memref<8x128xf32, #tpu.memory_space<vmem>>, vector<8x128xf32>
    tpu.vector_store %arg5[%c0_15, %c0_16], %15 {strides = array<i32>} : memref<8x128xf32, #tpu.memory_space<vmem>>, vector<8x128xf32>,
    %29 = arith.addf %15, %27 : vector<8x128xf32>
    %c0_17 = arith.constant 0 : index
    %c0_18 = arith.constant 0 : index
    %c0_19 = arith.constant 0 : index
    %30 = vector.load %arg4[%c0_17, %c0_18, %c0_19] : memref<1x8x128xf32, #tpu.memory_space<vmem>>, vector<1x8x128xf32>
    %31 = vector.shape_cast %30 : vector<1x8x128xf32> to vector<8x128xf32>
    %32 = vector.shape_cast %29 : vector<8x128xf32> to vector<1x8x128xf32>
    tpu.vector_store %arg4[%c0_17, %c0_18, %c0_19], %32 {strides = array<i32>} : memref<1x8x128xf32, #tpu.memory_space<vmem>>, vector<1x8x128xf32>,
    return
  }
  func.func @transform_0(%arg0: i32) -> (i32, i32, i32) {
    %c0_i32 = arith.constant 0 : i32
    %c0_i32_0 = arith.constant 0 : i32
    %c0_i32_1 = arith.constant 0 : i32
    return %arg0, %c0_i32, %c0_i32_0 : i32, i32, i32
  }
  func.func @transform_1(%arg0: i32) -> (i32, i32) {
    %c0_i32 = arith.constant 0 : i32
    %c0_i32_0 = arith.constant 0 : i32
    %c0_i32_1 = arith.constant 0 : i32
    return %c0_i32, %c0_i32_0 : i32, i32
  }
  func.func @transform_2(%arg0: i32) -> (i32, i32) {
    %c0_i32 = arith.constant 0 : i32
    %c0_i32_0 = arith.constant 0 : i32
    %c0_i32_1 = arith.constant 0 : i32
    return %c0_i32, %c0_i32_0 : i32, i32
  }
  func.func @transform_3(%arg0: i32) -> (i32, i32, i32) {
    %c0_i32 = arith.constant 0 : i32
    %c0_i32_0 = arith.constant 0 : i32
    %c0_i32_1 = arith.constant 0 : i32
    return %arg0, %c0_i32, %c0_i32_0 : i32, i32, i32
  }
}

</mosaic_0001>

<llo_original>
// kernel: forward_rollout.1
$region0: #{forward_rollout.1}
  #allocation0 [shape = 'u32[]', space=smem, size = 0x4, offset = 0x4, fixed_abs, tag = 'smem constant byte address 0x4 - core index']
  #allocation1 [shape = 'u32[144,128]{1,0:T(1,128)}', space=vmem, size = 0x12000, scoped, tag = 'internal scratch']
  #allocation2 [shape = 'f32[8,128]{1,0:T(8,128)}', space=vmem, size = 0x1000, scoped, tag = 'scratch operand']
  %s0 = inlined_call_operand.vmem [shape: f32[8,8,128], index: 0, kind: input, shape index: {}]
  %s1 = inlined_call_operand.vmem [shape: f32[8,128], index: 1, kind: input, shape index: {}]
  %s2 = inlined_call_operand.vmem [shape: f32[520,128], index: 2, kind: input, shape index: {}]
  %s3 = inlined_call_operand.vmem [shape: f32[8,8,128], index: 3, kind: output, shape index: {}]
  %s4 = sld [smem:[#allocation0]]
  $region49: #{forward_rollout.1} parent=0
    _
  %s6 = ssub.s32 1, %s4
  %s7 = scalar_select 0, %s6, %s4
  loop: start=0, step=1, limit=10
  $region2: #{forward_rollout.1} parent=0 // loop_pre_header
    _
  $region3: #{forward_rollout.1} parent=0 // loop_header
    %s9 = sphi 0, %s13
    %p10 = scmp.ge.s32.totalorder %s9, 10
    %s19 = sphi 0, %s21
    %s22 = sphi 0, %s19
    %s23 = sphi 0, %s22
    %s39 = sphi 0, %s23
    %s43 = sphi 0, %s43
    %s45 = sphi 0, %s43
    %s46 = sphi 0, %s45
    %s60 = sphi 0, %s46
    %s64 = sphi 0, %s64
    %s66 = sphi 0, %s64
    %s67 = sphi 0, %s66
    %s81 = sphi 0, %s67
    %s87 = sphi 0, %s89
    %s90 = sphi 0, %s87
    %s91 = sphi 0, %s90
    %s107 = sphi 0, %s91
  $region4: #{forward_rollout.1} parent=0 // loop_header_branch
    %12 = sbr.rel (%p10) target = $region8
  $region5: #{forward_rollout.1} parent=0 // loop_body
    %s14 = ssub.s32 %s9, 1
    %s15 = ssub.s32 %s9, 2
    %s16 = sadd.s32 %s9, 1
    %s17 = ssub.s32 %s9, %s16
    %p18 = scmp.eq.s32.totalorder %s17, 0
    %s20 = sadd.s32 %s19, 1
    %s21 = scalar_select %p18, %s19, %s20
    %p24 = pneg %p18
    %p25 = scmp.eq.s32.totalorder %s9, 7
    %p26 = por %p24, %p25
    %p27 = scmp.ne.s32.totalorder %s19, %s22
    %p28 = scmp.eq.s32.totalorder %s9, 0
    %p29 = por %p27, %p28
    %p30 = scmp.ne.s32.totalorder %s19, %s22
    %p31 = scmp.eq.s32.totalorder %s14, 7
    %p32 = por %p30, %p31
    %p33 = scmp.ne.s32.totalorder %s22, %s23
    %p34 = scmp.eq.s32.totalorder %s14, 0
    %p35 = por %p33, %p34
    %p36 = scmp.ne.s32.totalorder %s22, %s23
    %p37 = scmp.eq.s32.totalorder %s15, 7
    %p38 = por %p36, %p37
    %p40 = scmp.ne.s32.totalorder %s23, %s39
    %p41 = scmp.eq.s32.totalorder %s15, 0
    %p42 = por %p40, %p41
    %s44 = sadd.s32 %s43, 1
    %p47 = scmp.eq.s32.totalorder %s9, 7
    %p48 = scmp.ne.s32.totalorder %s43, %s45
    %p49 = scmp.eq.s32.totalorder %s9, 0
    %p50 = por %p48, %p49
    %p51 = scmp.ne.s32.totalorder %s43, %s45
    %p52 = scmp.eq.s32.totalorder %s14, 7
    %p53 = por %p51, %p52
    %p54 = scmp.ne.s32.totalorder %s45, %s46
    %p55 = scmp.eq.s32.totalorder %s14, 0
    %p56 = por %p54, %p55
    %p57 = scmp.ne.s32.totalorder %s45, %s46
    %p58 = scmp.eq.s32.totalorder %s15, 7
    %p59 = por %p57, %p58
    %p61 = scmp.ne.s32.totalorder %s46, %s60
    %p62 = scmp.eq.s32.totalorder %s15, 0
    %p63 = por %p61, %p62
    %s65 = sadd.s32 %s64, 1
    %p68 = scmp.eq.s32.totalorder %s9, 7
    %p69 = scmp.ne.s32.totalorder %s64, %s66
    %p70 = scmp.eq.s32.totalorder %s9, 0
    %p71 = por %p69, %p70
    %p72 = scmp.ne.s32.totalorder %s64, %s66
    %p73 = scmp.eq.s32.totalorder %s14, 7
    %p74 = por %p72, %p73
    %p75 = scmp.ne.s32.totalorder %s66, %s67
    %p76 = scmp.eq.s32.totalorder %s14, 0
    %p77 = por %p75, %p76
    %p78 = scmp.ne.s32.totalorder %s66, %s67
    %p79 = scmp.eq.s32.totalorder %s15, 7
    %p80 = por %p78, %p79
    %p82 = scmp.ne.s32.totalorder %s67, %s81
    %p83 = scmp.eq.s32.totalorder %s15, 0
    %p84 = por %p82, %p83
    %s85 = ssub.s32 %s9, %s16
    %p86 = scmp.eq.s32.totalorder %s85, 0
    %s88 = sadd.s32 %s87, 1
    %s89 = scalar_select %p86, %s87, %s88
    %p92 = pneg %p86
    %p93 = scmp.eq.s32.totalorder %s9, 7
    %p94 = por %p92, %p93
    %p95 = scmp.ne.s32.totalorder %s87, %s90
    %p96 = scmp.eq.s32.totalorder %s9, 0
    %p97 = por %p95, %p96
    %p98 = scmp.ne.s32.totalorder %s87, %s90
    %p99 = scmp.eq.s32.totalorder %s14, 7
    %p100 = por %p98, %p99
    %p101 = scmp.ne.s32.totalorder %s90, %s91
    %p102 = scmp.eq.s32.totalorder %s14, 0
    %p103 = por %p101, %p102
    %p104 = scmp.ne.s32.totalorder %s90, %s91
    %p105 = scmp.eq.s32.totalorder %s15, 7
    %p106 = por %p104, %p105
    %p108 = scmp.ne.s32.totalorder %s91, %s107
    %p109 = scmp.eq.s32.totalorder %s15, 0
    %p110 = por %p108, %p109
    %p111 = scmp.le.s32.totalorder 1, %s9
    %p112 = scmp.lt.s32.totalorder %s9, 9
    %p113 = pnand %p111, %p112
    %p114 = pneg %p113
    // Predicated region
    $region9: #{forward_rollout.1} parent=5 // pred_check
      _
    $region10: #{forward_rollout.1} parent=5 // pred_check_branch
      %116 = sbr.rel (%p113) target = $region12
    $region11: #{forward_rollout.1} parent=5 // pred_region
      %s117 = ssub.s32 %s9, 1
      // Predicated region
      $region13: #{forward_rollout.1} parent=11 // pred_check
        %p118 = pneg %p56
      $region14: #{forward_rollout.1} parent=11 // pred_check_branch
        %120 = sbr.rel (%p118) target = $region16
      $region15: #{forward_rollout.1} parent=11 // pred_region
        _
      $region16: #{forward_rollout.1} parent=11 // pred_fallthru
        _
      // Predicated region
      $region17: #{forward_rollout.1} parent=11 // pred_check
        %p121 = pneg %p77
      $region18: #{forward_rollout.1} parent=11 // pred_check_branch
        %123 = sbr.rel (%p121) target = $region20
      $region19: #{forward_rollout.1} parent=11 // pred_region
        _
      $region20: #{forward_rollout.1} parent=11 // pred_fallthru
        _
    $region12: #{forward_rollout.1} parent=5 // pred_fallthru
      _
    %p124 = scmp.lt.s32.totalorder %s9, 8
    // Predicated region
    $region21: #{forward_rollout.1} parent=5 // pred_check
      %p125 = pneg %p124
    $region22: #{forward_rollout.1} parent=5 // pred_check_branch
      %127 = sbr.rel (%p125) target = $region24
    $region23: #{forward_rollout.1} parent=5 // pred_region
      // Predicated region
      $region25: #{forward_rollout.1} parent=23 // pred_check
        %p128 = pneg %p29
      $region26: #{forward_rollout.1} parent=23 // pred_check_branch
        %130 = sbr.rel (%p128) target = $region28
      $region27: #{forward_rollout.1} parent=23 // pred_region
        %p131 = scmp.lt.s32.totalorder %s9, 7
        %s132 = scalar_select %p131, %s9, 7
        %s133 = smul.addr %s132, 8
        %s134 = scalar_lea.vmem %s0, %s133
      $region28: #{forward_rollout.1} parent=23 // pred_fallthru
        _
    $region24: #{forward_rollout.1} parent=5 // pred_fallthru
      _
    %p135 = scmp.le.s32.totalorder 1, %s9
    %p136 = scmp.lt.s32.totalorder %s9, 9
    %p137 = pnand %p135, %p136
    %p138 = pneg %p137
    // Predicated region
    $region29: #{forward_rollout.1} parent=5 // pred_check
      _
    $region30: #{forward_rollout.1} parent=5 // pred_check_branch
      %140 = sbr.rel (%p137) target = $region32
    $region31: #{forward_rollout.1} parent=5 // pred_region
      %s141 = ssub.s32 %s9, 1
      %p142 = scmp.lt.s32.totalorder %s14, 7
      %s143 = scalar_select %p142, %s14, 7
      %s144 = smul.addr %s143, 8
      %s145 = scalar_lea.vmem %s0, %s144
      %p146 = pneg %p35
      %p147 = pneg %p32
      %p148 = pneg %p56
      %p149 = pneg %p53
      %p150 = pneg %p77
      %p151 = pneg %p74
      %p152 = pneg %p103
      %p153 = pneg %p100
      %p154 = scmp.lt.s32.totalorder %s14, 7
      %s155 = scalar_select %p154, %s14, 7
      %s156 = smul.addr %s155, 8
      %s157 = scalar_lea.vmem %s3, %s156
      %p158 = scmp.lt.s32.totalorder %s14, 7
      %s159 = scalar_select %p158, %s14, 7
      %s160 = smul.addr %s159, 8
      %s161 = scalar_lea.vmem %s0, %s160
      %p162 = scmp.lt.s32.totalorder %s14, 7
      %s163 = scalar_select %p162, %s14, 7
      %s164 = smul.addr %s163, 8
      %s165 = scalar_lea.vmem %s3, %s164
      %p166 = scmp.eq.s32.totalorder %s14, 0
      // Predicated region
      $region33: #{forward_rollout.1} parent=31 // pred_check
        %p167 = pneg %p166
      $region34: #{forward_rollout.1} parent=31 // pred_check_branch
        %169 = sbr.rel (%p167) target = $region36
      $region35: #{forward_rollout.1} parent=31 // pred_region
        %v170 = vld [vmem:[%s1] sm:$0xff]
        %171 = vst [vmem:[#allocation2] sm:$0xff] %v170
      $region36: #{forward_rollout.1} parent=31 // pred_fallthru
        _
      %v172 = vld [vmem:[%s2 + $0x200] sm:$0xff]
      %v173 = vld [vmem:[%s161] sm:$0xff]
      %v174 = vld [vmem:[#allocation2] sm:$0xff]
      %v175 = vld [vmem:[%s2] sm:$0xff]
      %v176 = vld [vmem:[%s2 + $0x8] sm:$0xff]
      %v177 = vld [vmem:[%s2 + $0x10] sm:$0xff]
      %v178 = vld [vmem:[%s2 + $0x18] sm:$0xff]
      %v179 = vld [vmem:[%s2 + $0x20] sm:$0xff]
      %v180 = vld [vmem:[%s2 + $0x28] sm:$0xff]
      %v181 = vld [vmem:[%s2 + $0x30] sm:$0xff]
      %v182 = vld [vmem:[%s2 + $0x38] sm:$0xff]
      %v183 = vld [vmem:[%s2 + $0x40] sm:$0xff]
      %v184 = vld [vmem:[%s2 + $0x48] sm:$0xff]
      %v185 = vld [vmem:[%s2 + $0x50] sm:$0xff]
      %v186 = vld [vmem:[%s2 + $0x58] sm:$0xff]
      %v187 = vld [vmem:[%s2 + $0x60] sm:$0xff]
      %v188 = vld [vmem:[%s2 + $0x68] sm:$0xff]
      %v189 = vld [vmem:[%s2 + $0x70] sm:$0xff]
      %v190 = vld [vmem:[%s2 + $0x78] sm:$0xff]
      %v191 = vld [vmem:[%s2 + $0x80] sm:$0xff]
      %v192 = vld [vmem:[%s2 + $0x88] sm:$0xff]
      %v193 = vld [vmem:[%s2 + $0x90] sm:$0xff]
      %v194 = vld [vmem:[%s2 + $0x98] sm:$0xff]
      %v195 = vld [vmem:[%s2 + $0xa0] sm:$0xff]
      %v196 = vld [vmem:[%s2 + $0xa8] sm:$0xff]
      %v197 = vld [vmem:[%s2 + $0xb0] sm:$0xff]
      %v198 = vld [vmem:[%s2 + $0xb8] sm:$0xff]
      %v199 = vld [vmem:[%s2 + $0xc0] sm:$0xff]
      %v200 = vld [vmem:[%s2 + $0xc8] sm:$0xff]
      %v201 = vld [vmem:[%s2 + $0xd0] sm:$0xff]
      %v202 = vld [vmem:[%s2 + $0xd8] sm:$0xff]
      %v203 = vld [vmem:[%s2 + $0xe0] sm:$0xff]
      %v204 = vld [vmem:[%s2 + $0xe8] sm:$0xff]
      %v205 = vld [vmem:[%s2 + $0xf0] sm:$0xff]
      %v206 = vld [vmem:[%s2 + $0xf8] sm:$0xff]
      %207 = vmatprep.subr.mxu0 0.0
      %208 = vmatpush1.msra.mxu0 %v206
      %209 = vmatprep.subr.mxu0 0.0
      %210 = vmatpush1.msra.mxu0 %v205
      %211 = vmatprep.subr.mxu0 0.0
      %212 = vmatpush1.msra.mxu0 %v204
      %213 = vmatprep.subr.mxu0 0.0
      %214 = vmatpush1.msra.mxu0 %v203
      %215 = vmatprep.subr.mxu0 0.0
      %216 = vmatpush1.msra.mxu0 %v202
      %217 = vmatprep.subr.mxu0 0.0
      %218 = vmatpush1.msra.mxu0 %v201
      %219 = vmatprep.subr.mxu0 0.0
      %220 = vmatpush1.msra.mxu0 %v200
      %221 = vmatprep.subr.mxu0 0.0
      %222 = vmatpush1.msra.mxu0 %v199
      %223 = vmatprep.subr.mxu0 0.0
      %224 = vmatpush1.msra.mxu0 %v198
      %225 = vmatprep.subr.mxu0 0.0
      %226 = vmatpush1.msra.mxu0 %v197
      %227 = vmatprep.subr.mxu0 0.0
      %228 = vmatpush1.msra.mxu0 %v196
      %229 = vmatprep.subr.mxu0 0.0
      %230 = vmatpush1.msra.mxu0 %v195
      %231 = vmatprep.subr.mxu0 0.0
      %232 = vmatpush1.msra.mxu0 %v194
      %233 = vmatprep.subr.mxu0 0.0
      %234 = vmatpush1.msra.mxu0 %v193
      %235 = vmatprep.subr.mxu0 0.0
      %236 = vmatpush1.msra.mxu0 %v192
      %237 = vmatprep.subr.mxu0 0.0
      %238 = vmatpush1.msra.mxu0 %v191
      %239 = vmatprep.subr.mxu0 0.0
      %240 = vmatpush2.msra.mxu0 0.0
      %241 = vmatprep.subr.mxu0 0.0
      %242 = vmatpush2.msra.mxu0 0.0
      %243 = vmatprep.subr.mxu0 0.0
      %244 = vmatpush2.msra.mxu0 0.0
      %245 = vmatprep.subr.mxu0 0.0
      %246 = vmatpush2.msra.mxu0 0.0
      %247 = vmatprep.subr.mxu0 0.0
      %248 = vmatpush2.msra.mxu0 0.0
      %249 = vmatprep.subr.mxu0 0.0
      %250 = vmatpush2.msra.mxu0 0.0
      %251 = vmatprep.subr.mxu0 0.0
      %252 = vmatpush2.msra.mxu0 0.0
      %253 = vmatprep.subr.mxu0 0.0
      %254 = vmatpush2.msra.mxu0 0.0
      %255 = vmatprep.subr.mxu0 0.0
      %256 = vmatpush2.msra.mxu0 0.0
      %257 = vmatprep.subr.mxu0 0.0
      %258 = vmatpush2.msra.mxu0 0.0
      %259 = vmatprep.subr.mxu0 0.0
      %260 = vmatpush2.msra.mxu0 0.0
      %261 = vmatprep.subr.mxu0 0.0
      %262 = vmatpush2.msra.mxu0 0.0
      %263 = vmatprep.subr.mxu0 0.0
      %264 = vmatpush2.msra.mxu0 0.0
      %265 = vmatprep.subr.mxu0 0.0
      %266 = vmatpush2.msra.mxu0 0.0
      %267 = vmatprep.subr.mxu0 0.0
      %268 = vmatpush2.msra.mxu0 0.0
      %269 = vmatprep.subr.mxu0 0.0
      %270 = vmatpush2.msra.mxu0 0.0
      %271 = vmatprep.mubr.f32.mxu0 0.0
      %272 = vmatmul.mubr.f32.gmra.mxu0 %v174
      %v273 = vpop.f32.mrf.mxu0
      %v274 = vadd.f32 0.0, %v273
      %v275 = vpop.f32.mrf.mxu0
      %276 = vdwg.mxu0
      %277 = vmatprep.subr.mxu0 0.0
      %278 = vmatpush1.msra.mxu0 %v190
      %279 = vmatprep.subr.mxu0 0.0
      %280 = vmatpush1.msra.mxu0 %v189
      %281 = vmatprep.subr.mxu0 0.0
      %282 = vmatpush1.msra.mxu0 %v188
      %283 = vmatprep.subr.mxu0 0.0
      %284 = vmatpush1.msra.mxu0 %v187
      %285 = vmatprep.subr.mxu0 0.0
      %286 = vmatpush1.msra.mxu0 %v186
      %287 = vmatprep.subr.mxu0 0.0
      %288 = vmatpush1.msra.mxu0 %v185
      %289 = vmatprep.subr.mxu0 0.0
      %290 = vmatpush1.msra.mxu0 %v184
      %291 = vmatprep.subr.mxu0 0.0
      %292 = vmatpush1.msra.mxu0 %v183
      %293 = vmatprep.subr.mxu0 0.0
      %294 = vmatpush1.msra.mxu0 %v182
      %295 = vmatprep.subr.mxu0 0.0
      %296 = vmatpush1.msra.mxu0 %v181
      %297 = vmatprep.subr.mxu0 0.0
      %298 = vmatpush1.msra.mxu0 %v180
      %299 = vmatprep.subr.mxu0 0.0
      %300 = vmatpush1.msra.mxu0 %v179
      %301 = vmatprep.subr.mxu0 0.0
      %302 = vmatpush1.msra.mxu0 %v178
      %303 = vmatprep.subr.mxu0 0.0
      %304 = vmatpush1.msra.mxu0 %v177
      %305 = vmatprep.subr.mxu0 0.0
      %306 = vmatpush1.msra.mxu0 %v176
      %307 = vmatprep.subr.mxu0 0.0
      %308 = vmatpush1.msra.mxu0 %v175
      %309 = vmatprep.subr.mxu0 0.0
      %310 = vmatpush2.msra.mxu0 0.0
      %311 = vmatprep.subr.mxu0 0.0
      %312 = vmatpush2.msra.mxu0 0.0
      %313 = vmatprep.subr.mxu0 0.0
      %314 = vmatpush2.msra.mxu0 0.0
      %315 = vmatprep.subr.mxu0 0.0
      %316 = vmatpush2.msra.mxu0 0.0
      %317 = vmatprep.subr.mxu0 0.0
      %318 = vmatpush2.msra.mxu0 0.0
      %319 = vmatprep.subr.mxu0 0.0
      %320 = vmatpush2.msra.mxu0 0.0
      %321 = vmatprep.subr.mxu0 0.0
      %322 = vmatpush2.msra.mxu0 0.0
      %323 = vmatprep.subr.mxu0 0.0
      %324 = vmatpush2.msra.mxu0 0.0
      %325 = vmatprep.subr.mxu0 0.0
      %326 = vmatpush2.msra.mxu0 0.0
      %327 = vmatprep.subr.mxu0 0.0
      %328 = vmatpush2.msra.mxu0 0.0
      %329 = vmatprep.subr.mxu0 0.0
      %330 = vmatpush2.msra.mxu0 0.0
      %331 = vmatprep.subr.mxu0 0.0
      %332 = vmatpush2.msra.mxu0 0.0
      %333 = vmatprep.subr.mxu0 0.0
      %334 = vmatpush2.msra.mxu0 0.0
      %335 = vmatprep.subr.mxu0 0.0
      %336 = vmatpush2.msra.mxu0 0.0
      %337 = vmatprep.subr.mxu0 0.0
      %338 = vmatpush2.msra.mxu0 0.0
      %339 = vmatprep.subr.mxu0 0.0
      %340 = vmatpush2.msra.mxu0 0.0
      %341 = vmatprep.mubr.f32.mxu0 0.0
      %342 = vmatmul.mubr.f32.gmra.mxu0 %v173
      %v343 = vpop.f32.mrf.mxu0
      %v344 = vadd.f32 %v274, %v343
      %v345 = vpop.f32.mrf.mxu0
      %346 = vdwg.mxu0
      %v347 = vlaneseq
      %v348 = vshrl.u32 %v347, 7
      %v349 = vsub.s32 0, %v348
      %v350 = vrot.slane %v172, %v349
      %v351 = vadd.f32 %v344, %v350
      %v352 = vtanh.pop %v351
      %v353 = vld [vmem:[%s2 + $0x100] sm:$0xff]
      %v354 = vld [vmem:[%s2 + $0x108] sm:$0xff]
      %v355 = vld [vmem:[%s2 + $0x110] sm:$0xff]
      %v356 = vld [vmem:[%s2 + $0x118] sm:$0xff]
      %v357 = vld [vmem:[%s2 + $0x120] sm:$0xff]
      %v358 = vld [vmem:[%s2 + $0x128] sm:$0xff]
      %v359 = vld [vmem:[%s2 + $0x130] sm:$0xff]
      %v360 = vld [vmem:[%s2 + $0x138] sm:$0xff]
      %v361 = vld [vmem:[%s2 + $0x140] sm:$0xff]
      %v362 = vld [vmem:[%s2 + $0x148] sm:$0xff]
      %v363 = vld [vmem:[%s2 + $0x150] sm:$0xff]
      %v364 = vld [vmem:[%s2 + $0x158] sm:$0xff]
      %v365 = vld [vmem:[%s2 + $0x160] sm:$0xff]
      %v366 = vld [vmem:[%s2 + $0x168] sm:$0xff]
      %v367 = vld [vmem:[%s2 + $0x170] sm:$0xff]
      %v368 = vld [vmem:[%s2 + $0x178] sm:$0xff]
      %v369 = vlaneseq
      %v370 = vshrl.u32 %v369, 7
      %v371 = vsub.s32 1, %v370
      %v372 = vrot.slane %v172, %v371
      %373 = vmatprep.subr.mxu0 0.0
      %374 = vmatpush1.msra.mxu0 %v368
      %375 = vmatprep.subr.mxu0 0.0
      %376 = vmatpush1.msra.mxu0 %v367
      %377 = vmatprep.subr.mxu0 0.0
      %378 = vmatpush1.msra.mxu0 %v366
      %379 = vmatprep.subr.mxu0 0.0
      %380 = vmatpush1.msra.mxu0 %v365
      %381 = vmatprep.subr.mxu0 0.0
      %382 = vmatpush1.msra.mxu0 %v364
      %383 = vmatprep.subr.mxu0 0.0
      %384 = vmatpush1.msra.mxu0 %v363
      %385 = vmatprep.subr.mxu0 0.0
      %386 = vmatpush1.msra.mxu0 %v362
      %387 = vmatprep.subr.mxu0 0.0
      %388 = vmatpush1.msra.mxu0 %v361
      %389 = vmatprep.subr.mxu0 0.0
      %390 = vmatpush1.msra.mxu0 %v360
      %391 = vmatprep.subr.mxu0 0.0
      %392 = vmatpush1.msra.mxu0 %v359
      %393 = vmatprep.subr.mxu0 0.0
      %394 = vmatpush1.msra.mxu0 %v358
      %395 = vmatprep.subr.mxu0 0.0
      %396 = vmatpush1.msra.mxu0 %v357
      %397 = vmatprep.subr.mxu0 0.0
      %398 = vmatpush1.msra.mxu0 %v356
      %399 = vmatprep.subr.mxu0 0.0
      %400 = vmatpush1.msra.mxu0 %v355
      %401 = vmatprep.subr.mxu0 0.0
      %402 = vmatpush1.msra.mxu0 %v354
      %403 = vmatprep.subr.mxu0 0.0
      %404 = vmatpush1.msra.mxu0 %v353
      %405 = vmatprep.subr.mxu0 0.0
      %406 = vmatpush2.msra.mxu0 0.0
      %407 = vmatprep.subr.mxu0 0.0
      %408 = vmatpush2.msra.mxu0 0.0
      %409 = vmatprep.subr.mxu0 0.0
      %410 = vmatpush2.msra.mxu0 0.0
      %411 = vmatprep.subr.mxu0 0.0
      %412 = vmatpush2.msra.mxu0 0.0
      %413 = vmatprep.subr.mxu0 0.0
      %414 = vmatpush2.msra.mxu0 0.0
      %415 = vmatprep.subr.mxu0 0.0
      %416 = vmatpush2.msra.mxu0 0.0
      %417 = vmatprep.subr.mxu0 0.0
      %418 = vmatpush2.msra.mxu0 0.0
      %419 = vmatprep.subr.mxu0 0.0
      %420 = vmatpush2.msra.mxu0 0.0
      %421 = vmatprep.subr.mxu0 0.0
      %422 = vmatpush2.msra.mxu0 0.0
      %423 = vmatprep.subr.mxu0 0.0
      %424 = vmatpush2.msra.mxu0 0.0
      %425 = vmatprep.subr.mxu0 0.0
      %426 = vmatpush2.msra.mxu0 0.0
      %427 = vmatprep.subr.mxu0 0.0
      %428 = vmatpush2.msra.mxu0 0.0
      %429 = vmatprep.subr.mxu0 0.0
      %430 = vmatpush2.msra.mxu0 0.0
      %431 = vmatprep.subr.mxu0 0.0
      %432 = vmatpush2.msra.mxu0 0.0
      %433 = vmatprep.subr.mxu0 0.0
      %434 = vmatpush2.msra.mxu0 0.0
      %435 = vmatprep.subr.mxu0 0.0
      %436 = vmatpush2.msra.mxu0 0.0
      %437 = vmatprep.mubr.f32.mxu0 0.0
      %438 = vmatmul.mubr.f32.gmra.mxu0 %v352
      %v439 = vpop.f32.mrf.mxu0
      %v440 = vadd.f32 %v372, %v439
      %v441 = vpop.f32.mrf.mxu0
      %442 = vdwg.mxu0
      %v443 = vmax.f32 %v440, 0.0
      %v444 = vld [vmem:[%s2 + $0x180] sm:$0xff]
      %v445 = vld [vmem:[%s2 + $0x188] sm:$0xff]
      %v446 = vld [vmem:[%s2 + $0x190] sm:$0xff]
      %v447 = vld [vmem:[%s2 + $0x198] sm:$0xff]
      %v448 = vld [vmem:[%s2 + $0x1a0] sm:$0xff]
      %v449 = vld [vmem:[%s2 + $0x1a8] sm:$0xff]
      %v450 = vld [vmem:[%s2 + $0x1b0] sm:$0xff]
      %v451 = vld [vmem:[%s2 + $0x1b8] sm:$0xff]
      %v452 = vld [vmem:[%s2 + $0x1c0] sm:$0xff]
      %v453 = vld [vmem:[%s2 + $0x1c8] sm:$0xff]
      %v454 = vld [vmem:[%s2 + $0x1d0] sm:$0xff]
      %v455 = vld [vmem:[%s2 + $0x1d8] sm:$0xff]
      %v456 = vld [vmem:[%s2 + $0x1e0] sm:$0xff]
      %v457 = vld [vmem:[%s2 + $0x1e8] sm:$0xff]
      %v458 = vld [vmem:[%s2 + $0x1f0] sm:$0xff]
      %v459 = vld [vmem:[%s2 + $0x1f8] sm:$0xff]
      %v460 = vlaneseq
      %v461 = vshrl.u32 %v460, 7
      %v462 = vsub.s32 2, %v461
      %v463 = vrot.slane %v172, %v462
      %464 = vmatprep.subr.mxu0 0.0
      %465 = vmatpush1.msra.mxu0 %v459
      %466 = vmatprep.subr.mxu0 0.0
      %467 = vmatpush1.msra.mxu0 %v458
      %468 = vmatprep.subr.mxu0 0.0
      %469 = vmatpush1.msra.mxu0 %v457
      %470 = vmatprep.subr.mxu0 0.0
      %471 = vmatpush1.msra.mxu0 %v456
      %472 = vmatprep.subr.mxu0 0.0
      %473 = vmatpush1.msra.mxu0 %v455
      %474 = vmatprep.subr.mxu0 0.0
      %475 = vmatpush1.msra.mxu0 %v454
      %476 = vmatprep.subr.mxu0 0.0
      %477 = vmatpush1.msra.mxu0 %v453
      %478 = vmatprep.subr.mxu0 0.0
      %479 = vmatpush1.msra.mxu0 %v452
      %480 = vmatprep.subr.mxu0 0.0
      %481 = vmatpush1.msra.mxu0 %v451
      %482 = vmatprep.subr.mxu0 0.0
      %483 = vmatpush1.msra.mxu0 %v450
      %484 = vmatprep.subr.mxu0 0.0
      %485 = vmatpush1.msra.mxu0 %v449
      %486 = vmatprep.subr.mxu0 0.0
      %487 = vmatpush1.msra.mxu0 %v448
      %488 = vmatprep.subr.mxu0 0.0
      %489 = vmatpush1.msra.mxu0 %v447
      %490 = vmatprep.subr.mxu0 0.0
      %491 = vmatpush1.msra.mxu0 %v446
      %492 = vmatprep.subr.mxu0 0.0
      %493 = vmatpush1.msra.mxu0 %v445
      %494 = vmatprep.subr.mxu0 0.0
      %495 = vmatpush1.msra.mxu0 %v444
      %496 = vmatprep.subr.mxu0 0.0
      %497 = vmatpush2.msra.mxu0 0.0
      %498 = vmatprep.subr.mxu0 0.0
      %499 = vmatpush2.msra.mxu0 0.0
      %500 = vmatprep.subr.mxu0 0.0
      %501 = vmatpush2.msra.mxu0 0.0
      %502 = vmatprep.subr.mxu0 0.0
      %503 = vmatpush2.msra.mxu0 0.0
      %504 = vmatprep.subr.mxu0 0.0
      %505 = vmatpush2.msra.mxu0 0.0
      %506 = vmatprep.subr.mxu0 0.0
      %507 = vmatpush2.msra.mxu0 0.0
      %508 = vmatprep.subr.mxu0 0.0
      %509 = vmatpush2.msra.mxu0 0.0
      %510 = vmatprep.subr.mxu0 0.0
      %511 = vmatpush2.msra.mxu0 0.0
      %512 = vmatprep.subr.mxu0 0.0
      %513 = vmatpush2.msra.mxu0 0.0
      %514 = vmatprep.subr.mxu0 0.0
      %515 = vmatpush2.msra.mxu0 0.0
      %516 = vmatprep.subr.mxu0 0.0
      %517 = vmatpush2.msra.mxu0 0.0
      %518 = vmatprep.subr.mxu0 0.0
      %519 = vmatpush2.msra.mxu0 0.0
      %520 = vmatprep.subr.mxu0 0.0
      %521 = vmatpush2.msra.mxu0 0.0
      %522 = vmatprep.subr.mxu0 0.0
      %523 = vmatpush2.msra.mxu0 0.0
      %524 = vmatprep.subr.mxu0 0.0
      %525 = vmatpush2.msra.mxu0 0.0
      %526 = vmatprep.subr.mxu0 0.0
      %527 = vmatpush2.msra.mxu0 0.0
      %528 = vmatprep.mubr.f32.mxu0 0.0
      %529 = vmatmul.mubr.f32.gmra.mxu0 %v443
      %v530 = vpop.f32.mrf.mxu0
      %v531 = vadd.f32 %v463, %v530
      %v532 = vpop.f32.mrf.mxu0
      %533 = vdwg.mxu0
      %534 = vst [vmem:[#allocation2] sm:$0xff] %v352
      %v535 = vadd.f32 %v352, %v531
      %536 = vst [vmem:[%s165] sm:$0xff] %v535
      %p537 = scmp.lt.s32.totalorder %s14, 7
      %s538 = scalar_select %p537, %s14, 7
      %s539 = smul.addr %s538, 8
      %s540 = scalar_lea.vmem %s3, %s539
      // Predicated region
      $region37: #{forward_rollout.1} parent=31 // pred_check
        %p541 = pneg %p100
      $region38: #{forward_rollout.1} parent=31 // pred_check_branch
        %543 = sbr.rel (%p541) target = $region40
      $region39: #{forward_rollout.1} parent=31 // pred_region
        _
      $region40: #{forward_rollout.1} parent=31 // pred_fallthru
        _
    $region32: #{forward_rollout.1} parent=5 // pred_fallthru
      _
    %p544 = scmp.le.s32.totalorder 2, %s9
    // Predicated region
    $region41: #{forward_rollout.1} parent=5 // pred_check
      %p545 = pneg %p544
    $region42: #{forward_rollout.1} parent=5 // pred_check_branch
      %547 = sbr.rel (%p545) target = $region44
    $region43: #{forward_rollout.1} parent=5 // pred_region
      %s548 = ssub.s32 %s9, 2
      // Predicated region
      $region45: #{forward_rollout.1} parent=43 // pred_check
        %p549 = pneg %p106
      $region46: #{forward_rollout.1} parent=43 // pred_check_branch
        %551 = sbr.rel (%p549) target = $region48
      $region47: #{forward_rollout.1} parent=43 // pred_region
        %p552 = scmp.lt.s32.totalorder %s15, 7
        %s553 = scalar_select %p552, %s15, 7
        %s554 = smul.addr %s553, 8
        %s555 = scalar_lea.vmem %s3, %s554
      $region48: #{forward_rollout.1} parent=43 // pred_fallthru
        _
    $region44: #{forward_rollout.1} parent=5 // pred_fallthru
      _
  $region6: #{forward_rollout.1} parent=0 // loop_footer
    %s13 = sadd.s32 1, %s9
  $region7: #{forward_rollout.1} parent=0 // loop_footer_branch
    %8 = sbr.rel target = $region3
  $region8: #{forward_rollout.1} parent=0 // loop_exit
    _

</llo_original>
